<compile_context>
chip_gen: v7x
topology: tpu7x:2x2x1
jax: 0.10.0
libtpu: 0.0.40
codegen_flags: <defaults>
</compile_context>

<pallas_src>
import math

import jax
import jax.numpy as jnp
from jax.experimental import pallas as pl
from jax.experimental.pallas import tpu as pltpu

_LANE = 128
_DEFAULT_VMEM_CAPACITY = 64 * 1024 * 1024  # v7x per-TC VMEM (smallest of all gens)


def _round_up(x, m):
    return ((x + m - 1) // m) * m


def _vmem_capacity_bytes():
    try:
        return int(pltpu.get_tpu_info().vmem_capacity_bytes)
    except Exception:
        return _DEFAULT_VMEM_CAPACITY


def _classification_head_kernel(x_ref, w_ref, b_ref, o_ref):
    """Fused hot path: logits = dropout(x) @ W + b  (dropout == identity, eval).

    x_ref : [TM, H]      streamed feature row tile (double-buffered)
    w_ref : [H, Lpad]    pre-transposed, lane-padded weight (resident)
    b_ref : [1, Lpad]    lane-padded bias (resident)
    o_ref : [TM, Lpad]   lane-dense fp32 logits tile (unmasked stores)
    """
    acc = jnp.dot(x_ref[...], w_ref[...], preferred_element_type=jnp.float32)
    o_ref[...] = (acc + b_ref[...].astype(jnp.float32)).astype(o_ref.dtype)


def prepare_out_proj_params(weight, bias, dtype=None):
    """One-time parameter prep (call at load time, NOT per forward).

    weight : [num_labels, H]  (PyTorch nn.Linear layout)
    bias   : [num_labels]
    Returns (w_pad [H, Lpad], b_pad [1, Lpad]) with Lpad = round_up(L, 128):
    pre-transposed and zero-padded to a lane-dense layout so the kernel never
    re-transposes the weight and output stores are unmasked.
    """
    if dtype is not None:
        weight = weight.astype(dtype)
        bias = bias.astype(dtype)
    num_labels, hidden = weight.shape
    l_pad = _round_up(num_labels, _LANE)
    w_pad = jnp.zeros((hidden, l_pad), weight.dtype).at[:, :num_labels].set(weight.T)
    b_pad = jnp.zeros((1, l_pad), bias.dtype).at[0, :num_labels].set(bias)
    return w_pad, b_pad


def classification_head_forward(
    features,
    w_pad,
    b_pad,
    num_labels,
    *,
    min_pallas_bytes=1 << 20,   # below this X-size, plain XLA is faster
    max_tile_rows=None,         # optional cap on TM (mostly for testing)
    keep_lane_padding=False,    # return [..., Lpad] (lets consumers skip the column slice)
):
    """JAX wrapper around the Pallas kernel.

    features : [..., H]
    w_pad    : [H, Lpad]  from prepare_out_proj_params
    b_pad    : [1, Lpad]  from prepare_out_proj_params
    returns  : [..., num_labels] fp32 logits (or [..., Lpad] if keep_lane_padding)
    """
    *lead, hidden = features.shape
    m = int(math.prod(lead)) if lead else 1
    l_pad = w_pad.shape[1]

    x2d = features.reshape(m, hidden)
    if w_pad.dtype != x2d.dtype:
        # Ideally done once at prep time; cheap (H x Lpad) if it does happen here.
        w_pad = w_pad.astype(x2d.dtype)

    x_itemsize = jnp.dtype(x2d.dtype).itemsize
    out_dtype = jnp.float32  # fp32-accumulated logits, independent of input dtype

    def _finish(out2d):
        if not keep_lane_padding:
            out2d = out2d[:, :num_labels]
        return out2d.reshape(*lead, out2d.shape[-1])

    # ---- small-M fast path: kernel launch + per-step overhead would dominate ----
    if m * hidden * x_itemsize < min_pallas_bytes:
        out = jnp.dot(x2d, w_pad, preferred_element_type=jnp.float32)
        out = (out + b_pad.astype(jnp.float32)).astype(out_dtype)
        return _finish(out)

    # ---- tile-size selection: byte-targeted, VMEM-budget aware ----
    gran = max(8, 32 // x_itemsize)            # sublane packing granularity (8 fp32 / 16 bf16)
    capacity = _vmem_capacity_bytes()
    budget = int(capacity * 0.75)              # headroom for Mosaic internal scratch

    row_bytes_x = hidden * x_itemsize
    row_bytes_o = l_pad * 4                    # fp32 output
    w_bytes = int(w_pad.size) * jnp.dtype(w_pad.dtype).itemsize
    b_bytes = int(b_pad.size) * 4

    target_tile_bytes = 4 * 1024 * 1024        # ~4 MiB X tile amortizes ~0.35us/step overhead
    tm = _round_up(max(1, target_tile_bytes // row_bytes_x), gran)
    tm = max(gran, min(tm, 2048))

    # Fit 2x X tile + 2x out tile + (single-buffered) W + bias under the budget.
    per_row = 2 * row_bytes_x + 2 * row_bytes_o
    avail = budget - (w_bytes + 2 * b_bytes) - (2 << 20)
    if avail > 0:
        tm = min(tm, max(gran, (avail // per_row) // gran * gran))
    if max_tile_rows is not None:
        tm = max(gran, min(tm, _round_up(max_tile_rows, gran)))
    tm = min(tm, _round_up(m, gran))           # don't tile past the data

    # Make sure a big-enough problem splits over >=2 tiles (v7x has 2 TensorCores).
    if m >= 512 and pl.cdiv(m, tm) < 2:
        tm = max(gran, _round_up(pl.cdiv(m, 2), gran))

    grid = (pl.cdiv(m, tm),)                   # ragged last tile handled by Pallas

    # Right-sized VMEM limit: actual requirement + slack, capped at the budget.
    need = 2 * tm * row_bytes_x + 2 * tm * row_bytes_o + w_bytes + 2 * b_bytes
    vmem_limit = int(max(16 << 20, min(need + (8 << 20), budget)))

    cost = pl.CostEstimate(
        flops=2 * m * hidden * l_pad,
        bytes_accessed=m * row_bytes_x + w_bytes + b_bytes + m * row_bytes_o,
        transcendentals=0,
    )

    def _call(single_buffer_resident):
        res_kwargs = (
            dict(pipeline_mode=pl.Buffered(1)) if single_buffer_resident else {}
        )
        return pl.pallas_call(
            _classification_head_kernel,
            out_shape=jax.ShapeDtypeStruct((m, l_pad), out_dtype),
            grid=grid,
            in_specs=[
                pl.BlockSpec((tm, hidden), lambda i: (i, 0)),               # streamed X tiles
                pl.BlockSpec((hidden, l_pad), lambda i: (0, 0), **res_kwargs),  # resident W
                pl.BlockSpec((1, l_pad), lambda i: (0, 0), **res_kwargs),       # resident b
            ],
            out_specs=pl.BlockSpec((tm, l_pad), lambda i: (i, 0)),
            compiler_params=pltpu.CompilerParams(
                dimension_semantics=("parallel",),   # M tiles independent (megacore-shardable)
                vmem_limit_bytes=vmem_limit,
            ),
            cost_estimate=cost,
        )(x2d, w_pad, b_pad)

    try:
        out = _call(True)
    except Exception:
        # pipeline_mode=pl.Buffered(1) unavailable on this JAX version;
        # default double-buffered resident operands are functionally identical.
        out = _call(False)

    return _finish(out)


def init_out_proj_params(key, hidden_size, num_labels, dtype=jnp.float32):
    """Deterministic nn.Linear-style init: U(-1/sqrt(fan_in), 1/sqrt(fan_in))."""
    k_w, k_b = jax.random.split(key)
    bound = 1.0 / math.sqrt(hidden_size)
    weight = jax.random.uniform(
        k_w, (num_labels, hidden_size), dtype=dtype, minval=-bound, maxval=bound
    )
    bias = jax.random.uniform(
        k_b, (num_labels,), dtype=dtype, minval=-bound, maxval=bound
    )
    return weight, bias


if __name__ == "__main__":
    key = jax.random.PRNGKey(0)
    k_x, k_p, k_x2 = jax.random.split(key, 3)

    # --- Case 1: small module-sized shapes, forced through the Pallas kernel ---
    batch, seq, hidden, num_labels = 2, 8, 32, 4
    features = jax.random.normal(k_x, (batch, seq, hidden), dtype=jnp.float32)
    weight, bias = init_out_proj_params(k_p, hidden, num_labels)
    w_pad, b_pad = prepare_out_proj_params(weight, bias)

    logits = classification_head_forward(
        features, w_pad, b_pad, num_labels, min_pallas_bytes=0  # force Pallas path
    )
    jax.block_until_ready(logits)
    ref = features @ weight.T + bias
    assert logits.shape == (batch, seq, num_labels)
    assert jnp.allclose(logits, ref, atol=1e-3, rtol=1e-3)

    # --- Case 2: ragged multi-tile grid (m=300 rows, 3 tiles of 128 rows) ---
    b2, s2, h2, l2 = 3, 100, 160, 5
    features2 = jax.random.normal(k_x2, (b2, s2, h2), dtype=jnp.float32)
    weight2, bias2 = init_out_proj_params(jax.random.PRNGKey(1), h2, l2)
    w_pad2, b_pad2 = prepare_out_proj_params(weight2, bias2)
    logits2 = classification_head_forward(
        features2, w_pad2, b_pad2, l2, min_pallas_bytes=0, max_tile_rows=128
    )
    jax.block_until_ready(logits2)
    ref2 = features2 @ weight2.T + bias2
    assert logits2.shape == (b2, s2, l2)
    assert jnp.allclose(logits2, ref2, atol=1e-3, rtol=1e-3)

    # --- Case 3: small-M fast path (plain XLA, no kernel launch) ---
    logits3 = classification_head_forward(features, w_pad, b_pad, num_labels)
    jax.block_until_ready(logits3)
    assert jnp.allclose(logits3, ref, atol=1e-3, rtol=1e-3)

    print("KERNEL_OK")
</pallas_src>

<mosaic_0001>
module attributes {stable_mosaic.version = 11 : i64} {
  func.func @_classification_head_kernel(%arg0: i32, %arg1: memref<16x32xf32, #tpu.memory_space<vmem>>, %arg2: memref<32x128xf32, #tpu.memory_space<vmem>>, %arg3: memref<1x128xf32, #tpu.memory_space<vmem>>, %arg4: memref<16x128xf32, #tpu.memory_space<vmem>>) attributes {dimension_semantics = [#tpu.dimension_semantics<parallel>], iteration_bounds = array<i64: 1>, scalar_prefetch = 0 : i64, scratch_operands = 0 : i64, tpu.core_type = #tpu.core_type<tc>, window_params = [{transform_indices = @transform_0, window_bounds = array<i64: 16, 32>}, {pipeline_mode = #tpu.pipeline_mode<synchronous>, transform_indices = @transform_1, window_bounds = array<i64: 32, 128>}, {pipeline_mode = #tpu.pipeline_mode<synchronous>, transform_indices = @transform_2, window_bounds = array<i64: 1, 128>}, {transform_indices = @transform_3, window_bounds = array<i64: 16, 128>}]} {
    %c0 = arith.constant 0 : index
    %c0_0 = arith.constant 0 : index
    %0 = vector.load %arg1[%c0, %c0_0] : memref<16x32xf32, #tpu.memory_space<vmem>>, vector<16x32xf32>
    %c0_1 = arith.constant 0 : index
    %c0_2 = arith.constant 0 : index
    %1 = vector.load %arg2[%c0_1, %c0_2] : memref<32x128xf32, #tpu.memory_space<vmem>>, vector<32x128xf32>
    %cst = arith.constant dense<0.000000e+00> : vector<16x128xf32>
    %2 = tpu.matmul %0, %1, %cst {dimension_numbers = #tpu.dot_dimension_numbers<[1], [0], [0], [1], [0, 0, 1, 1], [], []>} : vector<16x32xf32>, vector<32x128xf32>, vector<16x128xf32> -> vector<16x128xf32>
    %c0_3 = arith.constant 0 : index
    %c0_4 = arith.constant 0 : index
    %3 = vector.load %arg3[%c0_3, %c0_4] : memref<1x128xf32, #tpu.memory_space<vmem>>, vector<1x128xf32>
    %4 = vector.broadcast %3 : vector<1x128xf32> to vector<16x128xf32>
    %5 = arith.addf %2, %4 : vector<16x128xf32>
    %c0_5 = arith.constant 0 : index
    %c0_6 = arith.constant 0 : index
    %6 = vector.load %arg4[%c0_5, %c0_6] : memref<16x128xf32, #tpu.memory_space<vmem>>, vector<16x128xf32>
    tpu.vector_store %arg4[%c0_5, %c0_6], %5 {strides = array<i32>} : memref<16x128xf32, #tpu.memory_space<vmem>>, vector<16x128xf32>,
    return
  }
  func.func @transform_0(%arg0: i32) -> (i32, i32) {
    %c0_i32 = arith.constant 0 : i32
    %c0_i32_0 = arith.constant 0 : i32
    return %arg0, %c0_i32 : i32, i32
  }
  func.func @transform_1(%arg0: i32) -> (i32, i32) {
    %c0_i32 = arith.constant 0 : i32
    %c0_i32_0 = arith.constant 0 : i32
    %c0_i32_1 = arith.constant 0 : i32
    return %c0_i32, %c0_i32_0 : i32, i32
  }
  func.func @transform_2(%arg0: i32) -> (i32, i32) {
    %c0_i32 = arith.constant 0 : i32
    %c0_i32_0 = arith.constant 0 : i32
    %c0_i32_1 = arith.constant 0 : i32
    return %c0_i32, %c0_i32_0 : i32, i32
  }
  func.func @transform_3(%arg0: i32) -> (i32, i32) {
    %c0_i32 = arith.constant 0 : i32
    %c0_i32_0 = arith.constant 0 : i32
    return %arg0, %c0_i32 : i32, i32
  }
}

module attributes {stable_mosaic.version = 11 : i64} {
  func.func @_classification_head_kernel(%arg0: i32, %arg1: memref<16x32xf32, #tpu.memory_space<vmem>>, %arg2: memref<32x128xf32, #tpu.memory_space<vmem>>, %arg3: memref<1x128xf32, #tpu.memory_space<vmem>>, %arg4: memref<16x128xf32, #tpu.memory_space<vmem>>) attributes {dimension_semantics = [#tpu.dimension_semantics<parallel>], iteration_bounds = array<i64: 1>, scalar_prefetch = 0 : i64, scratch_operands = 0 : i64, tpu.core_type = #tpu.core_type<tc>, window_params = [{transform_indices = @transform_0, window_bounds = array<i64: 16, 32>}, {pipeline_mode = #tpu.pipeline_mode<synchronous>, transform_indices = @transform_1, window_bounds = array<i64: 32, 128>}, {pipeline_mode = #tpu.pipeline_mode<synchronous>, transform_indices = @transform_2, window_bounds = array<i64: 1, 128>}, {transform_indices = @transform_3, window_bounds = array<i64: 16, 128>}]} {
    %c0 = arith.constant 0 : index
    %c0_0 = arith.constant 0 : index
    %0 = vector.load %arg1[%c0, %c0_0] : memref<16x32xf32, #tpu.memory_space<vmem>>, vector<16x32xf32>
    %c0_1 = arith.constant 0 : index
    %c0_2 = arith.constant 0 : index
    %1 = vector.load %arg2[%c0_1, %c0_2] : memref<32x128xf32, #tpu.memory_space<vmem>>, vector<32x128xf32>
    %cst = arith.constant dense<0.000000e+00> : vector<16x128xf32>
    %2 = tpu.matmul %0, %1, %cst {dimension_numbers = #tpu.dot_dimension_numbers<[1], [0], [0], [1], [0, 0, 1, 1], [], []>} : vector<16x32xf32>, vector<32x128xf32>, vector<16x128xf32> -> vector<16x128xf32>
    %c0_3 = arith.constant 0 : index
    %c0_4 = arith.constant 0 : index
    %3 = vector.load %arg3[%c0_3, %c0_4] : memref<1x128xf32, #tpu.memory_space<vmem>>, vector<1x128xf32>
    %4 = vector.broadcast %3 : vector<1x128xf32> to vector<16x128xf32>
    %5 = arith.addf %2, %4 : vector<16x128xf32>
    %c0_5 = arith.constant 0 : index
    %c0_6 = arith.constant 0 : index
    %6 = vector.load %arg4[%c0_5, %c0_6] : memref<16x128xf32, #tpu.memory_space<vmem>>, vector<16x128xf32>
    tpu.vector_store %arg4[%c0_5, %c0_6], %5 {strides = array<i32>} : memref<16x128xf32, #tpu.memory_space<vmem>>, vector<16x128xf32>,
    return
  }
  func.func @transform_0(%arg0: i32) -> (i32, i32) {
    %c0_i32 = arith.constant 0 : i32
    %c0_i32_0 = arith.constant 0 : i32
    return %arg0, %c0_i32 : i32, i32
  }
  func.func @transform_1(%arg0: i32) -> (i32, i32) {
    %c0_i32 = arith.constant 0 : i32
    %c0_i32_0 = arith.constant 0 : i32
    %c0_i32_1 = arith.constant 0 : i32
    return %c0_i32, %c0_i32_0 : i32, i32
  }
  func.func @transform_2(%arg0: i32) -> (i32, i32) {
    %c0_i32 = arith.constant 0 : i32
    %c0_i32_0 = arith.constant 0 : i32
    %c0_i32_1 = arith.constant 0 : i32
    return %c0_i32, %c0_i32_0 : i32, i32
  }
  func.func @transform_3(%arg0: i32) -> (i32, i32) {
    %c0_i32 = arith.constant 0 : i32
    %c0_i32_0 = arith.constant 0 : i32
    return %arg0, %c0_i32 : i32, i32
  }
}

</mosaic_0001>

<llo_original>
// kernel: tpu_custom_call.1
$region0: #{tpu_custom_call.1}
  #allocation0 [shape = 'u32[]', space=smem, size = 0x4, offset = 0x4, fixed_abs, tag = 'smem constant byte address 0x4 - core index']
  #allocation1 [shape = 'u32[144,128]{1,0:T(1,128)}', space=vmem, size = 0x12000, scoped, tag = 'internal scratch']
  %s0 = inlined_call_operand.hbm [shape: f32[16,32], index: 0, kind: input, shape index: {}]
  %s1 = inlined_call_operand.hbm [shape: f32[32,128], index: 1, kind: input, shape index: {}]
  %s2 = inlined_call_operand.vmem [shape: f32[1,128], index: 2, kind: input, shape index: {}]
  %s3 = inlined_call_operand.hbm [shape: f32[16,128], index: 3, kind: output, shape index: {}]
  %s4 = sld [smem:[#allocation0]]
  $region30: #{tpu_custom_call.1} parent=0
    _
  %s6 = ssub.s32 1, %s4
  %s7 = scalar_select 0, %s6, %s4
  $region1: #{tpu_custom_call.1} parent=0
    #allocation2 [shape = 'u8[8192]{0}', space=vmem, size = 0x2000, scoped, tag = 'input window, operand 0, single buffered']
    #allocation3 [shape = 's32[1]{0}', space=sflag, size = 0x4, scoped, tag = 'scoped memory for tpu_custom_call.1']
    #allocation4 [shape = 's32[1]{0}', space=sflag, size = 0x4, scoped, tag = 'scoped memory for tpu_custom_call.1']
    #allocation5 [shape = 'u8[16384]{0}', space=vmem, size = 0x4000, scoped, tag = 'input window, operand 1, single buffered']
    #allocation6 [shape = 's32[1]{0}', space=sflag, size = 0x4, scoped, tag = 'scoped memory for tpu_custom_call.1']
    #allocation7 [shape = 'u8[8192]{0}', space=vmem, size = 0x2000, scoped, tag = 'output window, operand 0, single buffered']
    %8 = vsyncpa [#allocation3], 0
    %9 = vsyncpa [#allocation6], 0
    %10 = vsyncpa [#allocation4], 0
    // Predicated region
    $region2: #{tpu_custom_call.1} parent=1 // pred_check
      _
    $region3: #{tpu_custom_call.1} parent=1 // pred_check_branch
      %12 = sbr.rel (0) target = $region5
    $region4: #{tpu_custom_call.1} parent=1 // pred_region
      %s14 = ssub.s32 256, 256
      %15 = vsyncadd [#allocation3], %s14
      %s16 = sshll.u32 [#allocation2], 4
      %s17 = int_to_ptr.vmem [resolvable:$true] %s16
      %22 = dma.hbm_to_vmem [thread:$0]  %s0, 256, %s17, [#allocation3], 128, 128, 8
    $region5: #{tpu_custom_call.1} parent=1 // pred_fallthru
      _
    // Predicated region
    $region6: #{tpu_custom_call.1} parent=1 // pred_check
      _
    $region7: #{tpu_custom_call.1} parent=1 // pred_check_branch
      %24 = sbr.rel (0) target = $region9
    $region8: #{tpu_custom_call.1} parent=1 // pred_region
      %s26 = ssub.s32 512, 512
      %27 = vsyncadd [#allocation6], %s26
      %s28 = sshll.u32 [#allocation5], 4
      %s29 = int_to_ptr.vmem [resolvable:$true] %s28
      %34 = dma.hbm_to_vmem [thread:$0]  %s1, 512, %s29, [#allocation6], 128, 128, 8
    $region9: #{tpu_custom_call.1} parent=1 // pred_fallthru
      _
    // Predicated region
    $region10: #{tpu_custom_call.1} parent=1 // pred_check
      _
    $region11: #{tpu_custom_call.1} parent=1 // pred_check_branch
      %36 = sbr.rel (0) target = $region13
    $region12: #{tpu_custom_call.1} parent=1 // pred_region
      _
    $region13: #{tpu_custom_call.1} parent=1 // pred_fallthru
      _
    // Predicated region
    $region14: #{tpu_custom_call.1} parent=1 // pred_check
      _
    $region15: #{tpu_custom_call.1} parent=1 // pred_check_branch
      %38 = sbr.rel (0) target = $region17
    $region16: #{tpu_custom_call.1} parent=1 // pred_region
      %39 = dma.done [#allocation3], 256
    $region17: #{tpu_custom_call.1} parent=1 // pred_fallthru
      _
    // Predicated region
    $region18: #{tpu_custom_call.1} parent=1 // pred_check
      _
    $region19: #{tpu_custom_call.1} parent=1 // pred_check_branch
      %41 = sbr.rel (0) target = $region21
    $region20: #{tpu_custom_call.1} parent=1 // pred_region
      %42 = dma.done [#allocation6], 512
    $region21: #{tpu_custom_call.1} parent=1 // pred_fallthru
      _
    %v43 = vld [vmem:[#allocation2] sm:$0xff]
    %v44 = vld [vmem:[#allocation2 + $0x8] sm:$0xff]
    %v45 = vld [vmem:[#allocation5] sm:$0xff]
    %v46 = vld [vmem:[#allocation5 + $0x8] sm:$0xff]
    %v47 = vld [vmem:[#allocation5 + $0x10] sm:$0xff]
    %v48 = vld [vmem:[#allocation5 + $0x18] sm:$0xff]
    %v49 = vld [vmem:[%s2] sm:$0x1]
    %v51 = vlaneseq
    %v52 = vshrl.u32 %v51, 7
    %v53 = vsub.s32 0, %v52
    %v54 = vrot.slane %v49, %v53
    %vm56 = vcmask 261120
    %v58 = vsel %vm56, %v43, 0
    %v61 = vsel %vm56, %v44, 0
    %63 = vmatprep.subr.mxu0 0.0
    %64 = vmatpush1.msra.mxu0 %v45
    %65 = vmatprep.subr.mxu0 0.0
    %66 = vmatpush1.msra.mxu0 %v46
    %67 = vmatprep.subr.mxu0 0.0
    %68 = vmatpush1.msra.mxu0 %v47
    %69 = vmatprep.subr.mxu0 0.0
    %70 = vmatpush1.msra.mxu0 %v48
    %71 = vmatprep.subr.mxu0 0.0
    %72 = vmatpush1.msra.mxu0 0.0
    %73 = vmatprep.subr.mxu0 0.0
    %74 = vmatpush1.msra.mxu0 0.0
    %75 = vmatprep.subr.mxu0 0.0
    %76 = vmatpush1.msra.mxu0 0.0
    %77 = vmatprep.subr.mxu0 0.0
    %78 = vmatpush1.msra.mxu0 0.0
    %79 = vmatprep.subr.mxu0 0.0
    %80 = vmatpush1.msra.mxu0 0.0
    %81 = vmatprep.subr.mxu0 0.0
    %82 = vmatpush1.msra.mxu0 0.0
    %83 = vmatprep.subr.mxu0 0.0
    %84 = vmatpush1.msra.mxu0 0.0
    %85 = vmatprep.subr.mxu0 0.0
    %86 = vmatpush1.msra.mxu0 0.0
    %87 = vmatprep.subr.mxu0 0.0
    %88 = vmatpush1.msra.mxu0 0.0
    %89 = vmatprep.subr.mxu0 0.0
    %90 = vmatpush1.msra.mxu0 0.0
    %91 = vmatprep.subr.mxu0 0.0
    %92 = vmatpush1.msra.mxu0 0.0
    %93 = vmatprep.subr.mxu0 0.0
    %94 = vmatpush1.msra.mxu0 0.0
    %95 = vmatprep.subr.mxu0 0.0
    %96 = vmatpush1.msra.mxu0 0.0
    %97 = vmatprep.subr.mxu0 0.0
    %98 = vmatpush1.msra.mxu0 0.0
    %99 = vmatprep.subr.mxu0 0.0
    %100 = vmatpush1.msra.mxu0 0.0
    %101 = vmatprep.subr.mxu0 0.0
    %102 = vmatpush1.msra.mxu0 0.0
    %103 = vmatprep.subr.mxu0 0.0
    %104 = vmatpush1.msra.mxu0 0.0
    %105 = vmatprep.subr.mxu0 0.0
    %106 = vmatpush1.msra.mxu0 0.0
    %107 = vmatprep.subr.mxu0 0.0
    %108 = vmatpush1.msra.mxu0 0.0
    %109 = vmatprep.subr.mxu0 0.0
    %110 = vmatpush1.msra.mxu0 0.0
    %111 = vmatprep.subr.mxu0 0.0
    %112 = vmatpush1.msra.mxu0 0.0
    %113 = vmatprep.subr.mxu0 0.0
    %114 = vmatpush1.msra.mxu0 0.0
    %115 = vmatprep.subr.mxu0 0.0
    %116 = vmatpush1.msra.mxu0 0.0
    %117 = vmatprep.subr.mxu0 0.0
    %118 = vmatpush1.msra.mxu0 0.0
    %119 = vmatprep.subr.mxu0 0.0
    %120 = vmatpush1.msra.mxu0 0.0
    %121 = vmatprep.subr.mxu0 0.0
    %122 = vmatpush1.msra.mxu0 0.0
    %123 = vmatprep.subr.mxu0 0.0
    %124 = vmatpush1.msra.mxu0 0.0
    %125 = vmatprep.subr.mxu0 0.0
    %126 = vmatpush1.msra.mxu0 0.0
    %127 = vmatprep.mubr.f32.mxu0 0.0
    %128 = vmatmul.mubr.f32.gmra.mrb[0].mxu0 %v58
    %v129 = vpop.f32.mrb[0].mxu0
    %v130 = vadd.f32 %v54, %v129
    %v131 = vpop.f32.mrb[0].mxu0
    %132 = vmatprep.mubr.f32.mxu0 0.0
    %133 = vmatmul.mubr.f32.gmra.mrb[0].mxu0 %v61
    %v134 = vpop.f32.mrb[0].mxu0
    %v135 = vadd.f32 %v54, %v134
    %v136 = vpop.f32.mrb[0].mxu0
    %137 = vdwg.mxu0
    %138 = vst [vmem:[#allocation7] sm:$0xff] %v130
    %139 = vst [vmem:[#allocation7 + $0x8] sm:$0xff] %v135
    // Predicated region
    $region22: #{tpu_custom_call.1} parent=1 // pred_check
      _
    $region23: #{tpu_custom_call.1} parent=1 // pred_check_branch
      %141 = sbr.rel (0) target = $region25
    $region24: #{tpu_custom_call.1} parent=1 // pred_region
      %s143 = ssub.s32 256, 256
      %144 = vsyncadd [#allocation4], %s143
      %s145 = sshll.u32 [#allocation7], 4
      %s146 = int_to_ptr.vmem [resolvable:$true] %s145
      %151 = dma.vmem_to_hbm [thread:$0]  %s146, 256, %s3, [#allocation4], 128, 128, 8
    $region25: #{tpu_custom_call.1} parent=1 // pred_fallthru
      _
    // Predicated region
    $region26: #{tpu_custom_call.1} parent=1 // pred_check
      _
    $region27: #{tpu_custom_call.1} parent=1 // pred_check_branch
      %153 = sbr.rel (0) target = $region29
    $region28: #{tpu_custom_call.1} parent=1 // pred_region
      %154 = dma.done [#allocation4], 256
    $region29: #{tpu_custom_call.1} parent=1 // pred_fallthru
      _
    %155 = vsyncpa [#allocation3], 1
    %156 = vsyncpa [#allocation6], 1
    %157 = vsyncpa [#allocation4], 1

// kernel: tpu_custom_call.1
$region0: #{tpu_custom_call.1}
  #allocation0 [shape = 'u32[]', space=smem, size = 0x4, offset = 0x4, fixed_abs, tag = 'smem constant byte address 0x4 - core index']
  #allocation1 [shape = 'u32[144,128]{1,0:T(1,128)}', space=vmem, size = 0x12000, scoped, tag = 'internal scratch']
  %s0 = inlined_call_operand.hbm [shape: f32[16,32], index: 0, kind: input, shape index: {}]
  %s1 = inlined_call_operand.hbm [shape: f32[32,128], index: 1, kind: input, shape index: {}]
  %s2 = inlined_call_operand.vmem [shape: f32[1,128], index: 2, kind: input, shape index: {}]
  %s3 = inlined_call_operand.hbm [shape: f32[16,128], index: 3, kind: output, shape index: {}]
  %s4 = sld [smem:[#allocation0]]
  $region30: #{tpu_custom_call.1} parent=0
    _
  %s6 = ssub.s32 1, %s4
  %s7 = scalar_select 0, %s6, %s4
  $region1: #{tpu_custom_call.1} parent=0
    #allocation2 [shape = 'u8[8192]{0}', space=vmem, size = 0x2000, scoped, tag = 'input window, operand 0, single buffered']
    #allocation3 [shape = 's32[1]{0}', space=sflag, size = 0x4, scoped, tag = 'scoped memory for tpu_custom_call.1']
    #allocation4 [shape = 's32[1]{0}', space=sflag, size = 0x4, scoped, tag = 'scoped memory for tpu_custom_call.1']
    #allocation5 [shape = 'u8[16384]{0}', space=vmem, size = 0x4000, scoped, tag = 'input window, operand 1, single buffered']
    #allocation6 [shape = 's32[1]{0}', space=sflag, size = 0x4, scoped, tag = 'scoped memory for tpu_custom_call.1']
    #allocation7 [shape = 'u8[8192]{0}', space=vmem, size = 0x2000, scoped, tag = 'output window, operand 0, single buffered']
    %8 = vsyncpa [#allocation3], 0
    %9 = vsyncpa [#allocation6], 0
    %10 = vsyncpa [#allocation4], 0
    // Predicated region
    $region2: #{tpu_custom_call.1} parent=1 // pred_check
      _
    $region3: #{tpu_custom_call.1} parent=1 // pred_check_branch
      %12 = sbr.rel (0) target = $region5
    $region4: #{tpu_custom_call.1} parent=1 // pred_region
      %s14 = ssub.s32 256, 256
      %15 = vsyncadd [#allocation3], %s14
      %s16 = sshll.u32 [#allocation2], 4
      %s17 = int_to_ptr.vmem [resolvable:$true] %s16
      %22 = dma.hbm_to_vmem [thread:$0]  %s0, 256, %s17, [#allocation3], 128, 128, 8
    $region5: #{tpu_custom_call.1} parent=1 // pred_fallthru
      _
    // Predicated region
    $region6: #{tpu_custom_call.1} parent=1 // pred_check
      _
    $region7: #{tpu_custom_call.1} parent=1 // pred_check_branch
      %24 = sbr.rel (0) target = $region9
    $region8: #{tpu_custom_call.1} parent=1 // pred_region
      %s26 = ssub.s32 512, 512
      %27 = vsyncadd [#allocation6], %s26
      %s28 = sshll.u32 [#allocation5], 4
      %s29 = int_to_ptr.vmem [resolvable:$true] %s28
      %34 = dma.hbm_to_vmem [thread:$0]  %s1, 512, %s29, [#allocation6], 128, 128, 8
    $region9: #{tpu_custom_call.1} parent=1 // pred_fallthru
      _
    // Predicated region
    $region10: #{tpu_custom_call.1} parent=1 // pred_check
      _
    $region11: #{tpu_custom_call.1} parent=1 // pred_check_branch
      %36 = sbr.rel (0) target = $region13
    $region12: #{tpu_custom_call.1} parent=1 // pred_region
      _
    $region13: #{tpu_custom_call.1} parent=1 // pred_fallthru
      _
    // Predicated region
    $region14: #{tpu_custom_call.1} parent=1 // pred_check
      _
    $region15: #{tpu_custom_call.1} parent=1 // pred_check_branch
      %38 = sbr.rel (0) target = $region17
    $region16: #{tpu_custom_call.1} parent=1 // pred_region
      %39 = dma.done [#allocation3], 256
    $region17: #{tpu_custom_call.1} parent=1 // pred_fallthru
      _
    // Predicated region
    $region18: #{tpu_custom_call.1} parent=1 // pred_check
      _
    $region19: #{tpu_custom_call.1} parent=1 // pred_check_branch
      %41 = sbr.rel (0) target = $region21
    $region20: #{tpu_custom_call.1} parent=1 // pred_region
      %42 = dma.done [#allocation6], 512
    $region21: #{tpu_custom_call.1} parent=1 // pred_fallthru
      _
    %v43 = vld [vmem:[#allocation2] sm:$0xff]
    %v44 = vld [vmem:[#allocation2 + $0x8] sm:$0xff]
    %v45 = vld [vmem:[#allocation5] sm:$0xff]
    %v46 = vld [vmem:[#allocation5 + $0x8] sm:$0xff]
    %v47 = vld [vmem:[#allocation5 + $0x10] sm:$0xff]
    %v48 = vld [vmem:[#allocation5 + $0x18] sm:$0xff]
    %v49 = vld [vmem:[%s2] sm:$0x1]
    %v51 = vlaneseq
    %v52 = vshrl.u32 %v51, 7
    %v53 = vsub.s32 0, %v52
    %v54 = vrot.slane %v49, %v53
    %vm56 = vcmask 261120
    %v58 = vsel %vm56, %v43, 0
    %v61 = vsel %vm56, %v44, 0
    %63 = vmatprep.subr.mxu0 0.0
    %64 = vmatpush1.msra.mxu0 %v45
    %65 = vmatprep.subr.mxu0 0.0
    %66 = vmatpush1.msra.mxu0 %v46
    %67 = vmatprep.subr.mxu0 0.0
    %68 = vmatpush1.msra.mxu0 %v47
    %69 = vmatprep.subr.mxu0 0.0
    %70 = vmatpush1.msra.mxu0 %v48
    %71 = vmatprep.subr.mxu0 0.0
    %72 = vmatpush1.msra.mxu0 0.0
    %73 = vmatprep.subr.mxu0 0.0
    %74 = vmatpush1.msra.mxu0 0.0
    %75 = vmatprep.subr.mxu0 0.0
    %76 = vmatpush1.msra.mxu0 0.0
    %77 = vmatprep.subr.mxu0 0.0
    %78 = vmatpush1.msra.mxu0 0.0
    %79 = vmatprep.subr.mxu0 0.0
    %80 = vmatpush1.msra.mxu0 0.0
    %81 = vmatprep.subr.mxu0 0.0
    %82 = vmatpush1.msra.mxu0 0.0
    %83 = vmatprep.subr.mxu0 0.0
    %84 = vmatpush1.msra.mxu0 0.0
    %85 = vmatprep.subr.mxu0 0.0
    %86 = vmatpush1.msra.mxu0 0.0
    %87 = vmatprep.subr.mxu0 0.0
    %88 = vmatpush1.msra.mxu0 0.0
    %89 = vmatprep.subr.mxu0 0.0
    %90 = vmatpush1.msra.mxu0 0.0
    %91 = vmatprep.subr.mxu0 0.0
    %92 = vmatpush1.msra.mxu0 0.0
    %93 = vmatprep.subr.mxu0 0.0
    %94 = vmatpush1.msra.mxu0 0.0
    %95 = vmatprep.subr.mxu0 0.0
    %96 = vmatpush1.msra.mxu0 0.0
    %97 = vmatprep.subr.mxu0 0.0
    %98 = vmatpush1.msra.mxu0 0.0
    %99 = vmatprep.subr.mxu0 0.0
    %100 = vmatpush1.msra.mxu0 0.0
    %101 = vmatprep.subr.mxu0 0.0
    %102 = vmatpush1.msra.mxu0 0.0
    %103 = vmatprep.subr.mxu0 0.0
    %104 = vmatpush1.msra.mxu0 0.0
    %105 = vmatprep.subr.mxu0 0.0
    %106 = vmatpush1.msra.mxu0 0.0
    %107 = vmatprep.subr.mxu0 0.0
    %108 = vmatpush1.msra.mxu0 0.0
    %109 = vmatprep.subr.mxu0 0.0
    %110 = vmatpush1.msra.mxu0 0.0
    %111 = vmatprep.subr.mxu0 0.0
    %112 = vmatpush1.msra.mxu0 0.0
    %113 = vmatprep.subr.mxu0 0.0
    %114 = vmatpush1.msra.mxu0 0.0
    %115 = vmatprep.subr.mxu0 0.0
    %116 = vmatpush1.msra.mxu0 0.0
    %117 = vmatprep.subr.mxu0 0.0
    %118 = vmatpush1.msra.mxu0 0.0
    %119 = vmatprep.subr.mxu0 0.0
    %120 = vmatpush1.msra.mxu0 0.0
    %121 = vmatprep.subr.mxu0 0.0
    %122 = vmatpush1.msra.mxu0 0.0
    %123 = vmatprep.subr.mxu0 0.0
    %124 = vmatpush1.msra.mxu0 0.0
    %125 = vmatprep.subr.mxu0 0.0
    %126 = vmatpush1.msra.mxu0 0.0
    %127 = vmatprep.mubr.f32.mxu0 0.0
    %128 = vmatmul.mubr.f32.gmra.mrb[0].mxu0 %v58
    %v129 = vpop.f32.mrb[0].mxu0
    %v130 = vadd.f32 %v54, %v129
    %v131 = vpop.f32.mrb[0].mxu0
    %132 = vmatprep.mubr.f32.mxu0 0.0
    %133 = vmatmul.mubr.f32.gmra.mrb[0].mxu0 %v61
    %v134 = vpop.f32.mrb[0].mxu0
    %v135 = vadd.f32 %v54, %v134
    %v136 = vpop.f32.mrb[0].mxu0
    %137 = vdwg.mxu0
    %138 = vst [vmem:[#allocation7] sm:$0xff] %v130
    %139 = vst [vmem:[#allocation7 + $0x8] sm:$0xff] %v135
    // Predicated region
    $region22: #{tpu_custom_call.1} parent=1 // pred_check
      _
    $region23: #{tpu_custom_call.1} parent=1 // pred_check_branch
      %141 = sbr.rel (0) target = $region25
    $region24: #{tpu_custom_call.1} parent=1 // pred_region
      %s143 = ssub.s32 256, 256
      %144 = vsyncadd [#allocation4], %s143
      %s145 = sshll.u32 [#allocation7], 4
      %s146 = int_to_ptr.vmem [resolvable:$true] %s145
      %151 = dma.vmem_to_hbm [thread:$0]  %s146, 256, %s3, [#allocation4], 128, 128, 8
    $region25: #{tpu_custom_call.1} parent=1 // pred_fallthru
      _
    // Predicated region
    $region26: #{tpu_custom_call.1} parent=1 // pred_check
      _
    $region27: #{tpu_custom_call.1} parent=1 // pred_check_branch
      %153 = sbr.rel (0) target = $region29
    $region28: #{tpu_custom_call.1} parent=1 // pred_region
      %154 = dma.done [#allocation4], 256
    $region29: #{tpu_custom_call.1} parent=1 // pred_fallthru
      _
    %155 = vsyncpa [#allocation3], 1
    %156 = vsyncpa [#allocation6], 1
    %157 = vsyncpa [#allocation4], 1

</llo_original>
